<compile_context>
chip_gen: v7x
topology: tpu7x:2x2x1
jax: 0.10.0
libtpu: 0.0.40
codegen_flags: <defaults>
</compile_context>

<pallas_src>
import numpy as np
import jax
import jax.numpy as jnp
from jax.experimental import pallas as pl
from jax.experimental.pallas import tpu as pltpu

# Per foreground class i (sub-slab order inside the output):
#   0: sum(t1)            presence count (#voxels with argmax(target)==i)
#   1: sum(log(sel))      sel = fg where t1 else clamp(1-fg)  (CE, negated later)
#   2: sum(fg * t1)       dice intersection, fg channel
#   3: sum(fg)            dice denominator, fg prediction
#   4: sum(bg * (1-t1))   dice intersection, bg channel
#   5: sum(bg)            dice denominator, bg prediction
_N_STATS = 6
# TODO(synk): DiceLoss implementation is not given in the source file; a
# standard 2-class soft dice with smooth=1 (averaged over the 2 classes) is
# assumed here.
_SMOOTH = 1.0
_CLAMP_MIN = 1e-10


def _dfloss_stats_kernel(p_ref, lab_ref, out_ref):
    k = pl.program_id(2)

    @pl.when(k == 0)
    def _():
        out_ref[...] = jnp.zeros(out_ref.shape, out_ref.dtype)

    lab = lab_ref[0]                      # (TR, 128) int32 argmax labels
    C = p_ref.shape[1]
    TR = lab.shape[0]

    def _part(x):                         # (TR,128) f32 -> (8,128) partial sum
        if TR == 8:
            return x
        return x.reshape(TR // 8, 8, 128).sum(axis=0)

    for i in range(1, C):                 # unrolled over foreground classes
        fg = p_ref[0, i]                  # (TR, 128) predicted prob of class i
        is_fg = lab == i                  # == target[a,i].long() for one-hot target
        t1 = is_fg.astype(jnp.float32)
        bg = jnp.clip(1.0 - fg, _CLAMP_MIN, 1.0)          # clamp, as in source
        # Fused single-log CE summand: log(fg) where target==1 else log(bg).
        # (fg intentionally NOT clamped, as in the source.)
        log_sel = jnp.log(jnp.where(is_fg, fg, bg))

        base = (i - 1) * _N_STATS
        out_ref[0, base + 0] += _part(t1)
        out_ref[0, base + 1] += _part(log_sel)
        out_ref[0, base + 2] += _part(fg * t1)
        out_ref[0, base + 3] += _part(fg)
        out_ref[0, base + 4] += _part(bg * (1.0 - t1))
        out_ref[0, base + 5] += _part(bg)


def df_loss(net_output, target, *, tile_v=4096):
    """DFLoss.forward: sum over batch a and foreground classes i present in
    argmax(target[a]) of  NLL(log([clamp(1-p_i), p_i]), target_i)
                         + soft_dice_2class([clamp(1-p_i), p_i], onehot(target_i))."""
    B, C = net_output.shape[:2]
    assert target.shape == net_output.shape
    assert C >= 2
    NFG = C - 1
    V = int(np.prod(net_output.shape[2:]))
    assert V % 1024 == 0, "flattened spatial volume must be a multiple of 1024 (8*128)"
    R = V // 128                                          # rows of 128 lanes

    # Tile: multiple-of-8 row count dividing R, capped by tile_v and by a
    # v7x-safe VMEM budget (inputs x double-buffering comfortably <= ~32 MiB).
    tile_r = min(R, max(8, 8 * (tile_v // 1024)))
    while tile_r > 8 and 4 * (C + 1) * tile_r * 512 > (32 << 20):
        tile_r -= 8
    while R % tile_r:
        tile_r -= 8
    num_k = R // tile_r
    # 2-way "parallel" split of the reduction axis so both v7x TensorCores are
    # busy even when B == 1 (near no-op on single-TC v5e/v6e).
    n_split = 2 if (num_k % 2 == 0 and num_k >= 2) else 1
    kk = num_k // n_split

    p = net_output.reshape(B, C, R, 128).astype(jnp.float32)
    # NOTE: target is assumed one-hot (as DFLoss requires), so int labels carry
    # the exact same information as target[a, i].long() at 1/C the HBM bytes.
    labels = jnp.argmax(target.reshape(B, C, R, 128), axis=1).astype(jnp.int32)

    rows = _N_STATS * NFG
    in_block_bytes = (C + 1) * tile_r * 512               # p block + label block
    out_block_bytes = rows * 8 * 128 * 4
    vmem_limit = int(max(16 << 20,
                         4 * in_block_bytes + 2 * out_block_bytes + (2 << 20)))

    stats = pl.pallas_call(
        _dfloss_stats_kernel,
        out_shape=jax.ShapeDtypeStruct((B * n_split, rows, 8, 128), jnp.float32),
        grid=(B, n_split, kk),
        in_specs=[pl.BlockSpec((1, C, tile_r, 128),
                               lambda a, s, k: (a, 0, s * kk + k, 0)),
                  pl.BlockSpec((1, tile_r, 128),
                               lambda a, s, k: (a, s * kk + k, 0))],
        out_specs=pl.BlockSpec((1, rows, 8, 128),
                               lambda a, s, k: (a * n_split + s, 0, 0, 0)),
        compiler_params=pltpu.CompilerParams(
            dimension_semantics=("parallel", "parallel", "arbitrary"),
            vmem_limit_bytes=vmem_limit),
    )(p, labels)

    # (B*n_split, NFG*6, 8, 128) -> (B, NFG, 6): all final reductions here.
    s = stats.reshape(B, n_split, NFG, _N_STATS, 8, 128).sum(axis=(1, 4, 5))
    st1, log_sum, i1, sp1, i0, sp0 = [s[..., j] for j in range(_N_STATS)]
    n = jnp.float32(V)
    present = (st1 > 0).astype(jnp.float32)               # torch.unique(...) != 0
    ce = -log_sum / n                                     # NLLLoss mean reduction
    st0 = n - st1
    dice1 = 1.0 - (2.0 * i1 + _SMOOTH) / (sp1 + st1 + _SMOOTH)
    dice0 = 1.0 - (2.0 * i0 + _SMOOTH) / (sp0 + st0 + _SMOOTH)
    dice = 0.5 * (dice0 + dice1)
    return jnp.sum(present * (ce + dice))


def _reference_loss(net_output, target):
    """Pure-numpy re-statement of DFLoss.forward (with the assumed DiceLoss)."""
    B, C = net_output.shape[:2]
    tr = np.argmax(target, axis=1)
    total = 0.0
    for a in range(B):
        classes = np.unique(tr[a])
        classes = classes[classes != 0]
        for i in classes:
            tc = target[a, i].astype(np.int64)
            fg = net_output[a, i].astype(np.float64)
            bg = np.clip(1.0 - fg, _CLAMP_MIN, 1.0)
            ce = -np.mean(np.where(tc == 1, np.log(fg), np.log(bg)))
            t1 = (tc == 1).astype(np.float64)
            t0 = 1.0 - t1
            d1 = 1.0 - (2.0 * (fg * t1).sum() + _SMOOTH) / (fg.sum() + t1.sum() + _SMOOTH)
            d0 = 1.0 - (2.0 * (bg * t0).sum() + _SMOOTH) / (bg.sum() + t0.sum() + _SMOOTH)
            total += ce + 0.5 * (d0 + d1)
    return float(total)


if __name__ == "__main__":
    key = jax.random.PRNGKey(0)
    k1, k2 = jax.random.split(key)
    B, C, D, H, W = 2, 4, 8, 32, 64          # V = 16384 -> 4 reduction steps

    logits = jax.random.normal(k1, (B, C, D, H, W), jnp.float32)
    net_output = jax.nn.softmax(logits, axis=1)           # probabilities (NCDHW)
    labels = jax.random.randint(k2, (B, D, H, W), 0, C)
    target = jax.nn.one_hot(labels, C, axis=1, dtype=jnp.float32)  # (B,C,D,H,W)

    loss = df_loss(net_output, target)
    loss = jax.block_until_ready(loss)

    ref = _reference_loss(np.asarray(net_output), np.asarray(target))
    assert np.allclose(float(loss), ref, rtol=1e-3, atol=1e-3), (float(loss), ref)
    print("KERNEL_OK")
</pallas_src>

<mosaic_0001>
module attributes {stable_mosaic.version = 11 : i64} {
  func.func @_dfloss_stats_kernel(%arg0: i32, %arg1: i32, %arg2: i32, %arg3: memref<1x4x32x128xf32, #tpu.memory_space<vmem>>, %arg4: memref<1x32x128xi32, #tpu.memory_space<vmem>>, %arg5: memref<1x18x8x128xf32, #tpu.memory_space<vmem>>) attributes {dimension_semantics = [#tpu.dimension_semantics<parallel>, #tpu.dimension_semantics<parallel>, #tpu.dimension_semantics<arbitrary>], iteration_bounds = array<i64: 2, 2, 2>, scalar_prefetch = 0 : i64, scratch_operands = 0 : i64, tpu.core_type = #tpu.core_type<tc>, window_params = [{transform_indices = @transform_0, window_bounds = array<i64: 1, 4, 32, 128>}, {transform_indices = @transform_1, window_bounds = array<i64: 1, 32, 128>}, {transform_indices = @transform_2, window_bounds = array<i64: 1, 18, 8, 128>}]} {
    %c0_i32 = arith.constant 0 : i32
    %0 = arith.cmpi eq, %arg2, %c0_i32 : i32
    %1 = arith.extui %0 : i1 to i32
    %c0_i32_0 = arith.constant 0 : i32
    %2 = arith.cmpi ne, %1, %c0_i32_0 : i32
    scf.if %2 {
      %cst_171 = arith.constant 0.000000e+00 : f32
      %203 = vector.broadcast %cst_171 : f32 to vector<1x18x8x128xf32>
      %c0_172 = arith.constant 0 : index
      %c0_173 = arith.constant 0 : index
      %c0_174 = arith.constant 0 : index
      %c0_175 = arith.constant 0 : index
      %204 = vector.load %arg5[%c0_172, %c0_173, %c0_174, %c0_175] : memref<1x18x8x128xf32, #tpu.memory_space<vmem>>, vector<1x18x8x128xf32>
      tpu.vector_store %arg5[%c0_172, %c0_173, %c0_174, %c0_175], %203 {strides = array<i32>} : memref<1x18x8x128xf32, #tpu.memory_space<vmem>>, vector<1x18x8x128xf32>,
    } else {
    }
    %c0 = arith.constant 0 : index
    %c0_1 = arith.constant 0 : index
    %c0_2 = arith.constant 0 : index
    %3 = vector.load %arg4[%c0, %c0_1, %c0_2] : memref<1x32x128xi32, #tpu.memory_space<vmem>>, vector<1x32x128xi32>
    %4 = vector.shape_cast %3 : vector<1x32x128xi32> to vector<32x128xi32>
    %c0_3 = arith.constant 0 : index
    %c1 = arith.constant 1 : index
    %c0_4 = arith.constant 0 : index
    %c0_5 = arith.constant 0 : index
    %5 = vector.load %arg3[%c0_3, %c1, %c0_4, %c0_5] : memref<1x4x32x128xf32, #tpu.memory_space<vmem>>, vector<1x1x32x128xf32>
    %6 = vector.shape_cast %5 : vector<1x1x32x128xf32> to vector<32x128xf32>
    %c1_i32 = arith.constant 1 : i32
    %7 = vector.broadcast %c1_i32 : i32 to vector<32x128xi32>
    %8 = arith.cmpi eq, %4, %7 : vector<32x128xi32>
    %9 = arith.extui %8 : vector<32x128xi1> to vector<32x128xi32>
    %10 = arith.sitofp %9 : vector<32x128xi32> to vector<32x128xf32>
    %cst = arith.constant 1.000000e+00 : f32
    %11 = vector.broadcast %cst : f32 to vector<32x128xf32>
    %12 = arith.subf %11, %6 : vector<32x128xf32>
    %cst_6 = arith.constant 1.000000e-10 : f32
    %cst_7 = arith.constant 1.000000e+00 : f32
    %13 = vector.broadcast %cst_6 : f32 to vector<32x128xf32>
    %14 = arith.maximumf %13, %12 : vector<32x128xf32>
    %15 = vector.broadcast %cst_7 : f32 to vector<32x128xf32>
    %16 = arith.minimumf %15, %14 : vector<32x128xf32>
    %17 = arith.select %8, %6, %16 : vector<32x128xi1>, vector<32x128xf32>
    %18 = math.log %17 : vector<32x128xf32>
    %c0_8 = arith.constant 0 : index
    %c0_9 = arith.constant 0 : index
    %c0_10 = arith.constant 0 : index
    %c0_11 = arith.constant 0 : index
    %19 = vector.load %arg5[%c0_8, %c0_9, %c0_10, %c0_11] : memref<1x18x8x128xf32, #tpu.memory_space<vmem>>, vector<1x1x8x128xf32>
    %20 = vector.shape_cast %19 : vector<1x1x8x128xf32> to vector<8x128xf32>
    %21 = vector.shape_cast %10 : vector<32x128xf32> to vector<4x8x128xf32>
    %cst_12 = arith.constant dense<0.000000e+00> : vector<8x128xf32>
    %22 = vector.multi_reduction <add>, %21, %cst_12 [0] : vector<4x8x128xf32> to vector<8x128xf32>
    %23 = arith.addf %20, %22 : vector<8x128xf32>
    %c0_13 = arith.constant 0 : index
    %c0_14 = arith.constant 0 : index
    %c0_15 = arith.constant 0 : index
    %c0_16 = arith.constant 0 : index
    %24 = vector.load %arg5[%c0_13, %c0_14, %c0_15, %c0_16] : memref<1x18x8x128xf32, #tpu.memory_space<vmem>>, vector<1x1x8x128xf32>
    %25 = vector.shape_cast %24 : vector<1x1x8x128xf32> to vector<8x128xf32>
    %26 = vector.shape_cast %23 : vector<8x128xf32> to vector<1x1x8x128xf32>
    tpu.vector_store %arg5[%c0_13, %c0_14, %c0_15, %c0_16], %26 {strides = array<i32>} : memref<1x18x8x128xf32, #tpu.memory_space<vmem>>, vector<1x1x8x128xf32>,
    %c0_17 = arith.constant 0 : index
    %c1_18 = arith.constant 1 : index
    %c0_19 = arith.constant 0 : index
    %c0_20 = arith.constant 0 : index
    %27 = vector.load %arg5[%c0_17, %c1_18, %c0_19, %c0_20] : memref<1x18x8x128xf32, #tpu.memory_space<vmem>>, vector<1x1x8x128xf32>
    %28 = vector.shape_cast %27 : vector<1x1x8x128xf32> to vector<8x128xf32>
    %29 = vector.shape_cast %18 : vector<32x128xf32> to vector<4x8x128xf32>
    %cst_21 = arith.constant dense<0.000000e+00> : vector<8x128xf32>
    %30 = vector.multi_reduction <add>, %29, %cst_21 [0] : vector<4x8x128xf32> to vector<8x128xf32>
    %31 = arith.addf %28, %30 : vector<8x128xf32>
    %c0_22 = arith.constant 0 : index
    %c1_23 = arith.constant 1 : index
    %c0_24 = arith.constant 0 : index
    %c0_25 = arith.constant 0 : index
    %32 = vector.load %arg5[%c0_22, %c1_23, %c0_24, %c0_25] : memref<1x18x8x128xf32, #tpu.memory_space<vmem>>, vector<1x1x8x128xf32>
    %33 = vector.shape_cast %32 : vector<1x1x8x128xf32> to vector<8x128xf32>
    %34 = vector.shape_cast %31 : vector<8x128xf32> to vector<1x1x8x128xf32>
    tpu.vector_store %arg5[%c0_22, %c1_23, %c0_24, %c0_25], %34 {strides = array<i32>} : memref<1x18x8x128xf32, #tpu.memory_space<vmem>>, vector<1x1x8x128xf32>,
    %c0_26 = arith.constant 0 : index
    %c2 = arith.constant 2 : index
    %c0_27 = arith.constant 0 : index
    %c0_28 = arith.constant 0 : index
    %35 = vector.load %arg5[%c0_26, %c2, %c0_27, %c0_28] : memref<1x18x8x128xf32, #tpu.memory_space<vmem>>, vector<1x1x8x128xf32>
    %36 = vector.shape_cast %35 : vector<1x1x8x128xf32> to vector<8x128xf32>
    %37 = arith.mulf %6, %10 : vector<32x128xf32>
    %38 = vector.shape_cast %37 : vector<32x128xf32> to vector<4x8x128xf32>
    %cst_29 = arith.constant dense<0.000000e+00> : vector<8x128xf32>
    %39 = vector.multi_reduction <add>, %38, %cst_29 [0] : vector<4x8x128xf32> to vector<8x128xf32>
    %40 = arith.addf %36, %39 : vector<8x128xf32>
    %c0_30 = arith.constant 0 : index
    %c2_31 = arith.constant 2 : index
    %c0_32 = arith.constant 0 : index
    %c0_33 = arith.constant 0 : index
    %41 = vector.load %arg5[%c0_30, %c2_31, %c0_32, %c0_33] : memref<1x18x8x128xf32, #tpu.memory_space<vmem>>, vector<1x1x8x128xf32>
    %42 = vector.shape_cast %41 : vector<1x1x8x128xf32> to vector<8x128xf32>
    %43 = vector.shape_cast %40 : vector<8x128xf32> to vector<1x1x8x128xf32>
    tpu.vector_store %arg5[%c0_30, %c2_31, %c0_32, %c0_33], %43 {strides = array<i32>} : memref<1x18x8x128xf32, #tpu.memory_space<vmem>>, vector<1x1x8x128xf32>,
    %c0_34 = arith.constant 0 : index
    %c3 = arith.constant 3 : index
    %c0_35 = arith.constant 0 : index
    %c0_36 = arith.constant 0 : index
    %44 = vector.load %arg5[%c0_34, %c3, %c0_35, %c0_36] : memref<1x18x8x128xf32, #tpu.memory_space<vmem>>, vector<1x1x8x128xf32>
    %45 = vector.shape_cast %44 : vector<1x1x8x128xf32> to vector<8x128xf32>
    %46 = vector.shape_cast %6 : vector<32x128xf32> to vector<4x8x128xf32>
    %cst_37 = arith.constant dense<0.000000e+00> : vector<8x128xf32>
    %47 = vector.multi_reduction <add>, %46, %cst_37 [0] : vector<4x8x128xf32> to vector<8x128xf32>
    %48 = arith.addf %45, %47 : vector<8x128xf32>
    %c0_38 = arith.constant 0 : index
    %c3_39 = arith.constant 3 : index
    %c0_40 = arith.constant 0 : index
    %c0_41 = arith.constant 0 : index
    %49 = vector.load %arg5[%c0_38, %c3_39, %c0_40, %c0_41] : memref<1x18x8x128xf32, #tpu.memory_space<vmem>>, vector<1x1x8x128xf32>
    %50 = vector.shape_cast %49 : vector<1x1x8x128xf32> to vector<8x128xf32>
    %51 = vector.shape_cast %48 : vector<8x128xf32> to vector<1x1x8x128xf32>
    tpu.vector_store %arg5[%c0_38, %c3_39, %c0_40, %c0_41], %51 {strides = array<i32>} : memref<1x18x8x128xf32, #tpu.memory_space<vmem>>, vector<1x1x8x128xf32>,
    %c0_42 = arith.constant 0 : index
    %c4 = arith.constant 4 : index
    %c0_43 = arith.constant 0 : index
    %c0_44 = arith.constant 0 : index
    %52 = vector.load %arg5[%c0_42, %c4, %c0_43, %c0_44] : memref<1x18x8x128xf32, #tpu.memory_space<vmem>>, vector<1x1x8x128xf32>
    %53 = vector.shape_cast %52 : vector<1x1x8x128xf32> to vector<8x128xf32>
    %cst_45 = arith.constant 1.000000e+00 : f32
    %54 = vector.broadcast %cst_45 : f32 to vector<32x128xf32>
    %55 = arith.subf %54, %10 : vector<32x128xf32>
    %56 = arith.mulf %16, %55 : vector<32x128xf32>
    %57 = vector.shape_cast %56 : vector<32x128xf32> to vector<4x8x128xf32>
    %cst_46 = arith.constant dense<0.000000e+00> : vector<8x128xf32>
    %58 = vector.multi_reduction <add>, %57, %cst_46 [0] : vector<4x8x128xf32> to vector<8x128xf32>
    %59 = arith.addf %53, %58 : vector<8x128xf32>
    %c0_47 = arith.constant 0 : index
    %c4_48 = arith.constant 4 : index
    %c0_49 = arith.constant 0 : index
    %c0_50 = arith.constant 0 : index
    %60 = vector.load %arg5[%c0_47, %c4_48, %c0_49, %c0_50] : memref<1x18x8x128xf32, #tpu.memory_space<vmem>>, vector<1x1x8x128xf32>
    %61 = vector.shape_cast %60 : vector<1x1x8x128xf32> to vector<8x128xf32>
    %62 = vector.shape_cast %59 : vector<8x128xf32> to vector<1x1x8x128xf32>
    tpu.vector_store %arg5[%c0_47, %c4_48, %c0_49, %c0_50], %62 {strides = array<i32>} : memref<1x18x8x128xf32, #tpu.memory_space<vmem>>, vector<1x1x8x128xf32>,
    %c0_51 = arith.constant 0 : index
    %c5 = arith.constant 5 : index
    %c0_52 = arith.constant 0 : index
    %c0_53 = arith.constant 0 : index
    %63 = vector.load %arg5[%c0_51, %c5, %c0_52, %c0_53] : memref<1x18x8x128xf32, #tpu.memory_space<vmem>>, vector<1x1x8x128xf32>
    %64 = vector.shape_cast %63 : vector<1x1x8x128xf32> to vector<8x128xf32>
    %65 = vector.shape_cast %16 : vector<32x128xf32> to vector<4x8x128xf32>
    %cst_54 = arith.constant dense<0.000000e+00> : vector<8x128xf32>
    %66 = vector.multi_reduction <add>, %65, %cst_54 [0] : vector<4x8x128xf32> to vector<8x128xf32>
    %67 = arith.addf %64, %66 : vector<8x128xf32>
    %c0_55 = arith.constant 0 : index
    %c5_56 = arith.constant 5 : index
    %c0_57 = arith.constant 0 : index
    %c0_58 = arith.constant 0 : index
    %68 = vector.load %arg5[%c0_55, %c5_56, %c0_57, %c0_58] : memref<1x18x8x128xf32, #tpu.memory_space<vmem>>, vector<1x1x8x128xf32>
    %69 = vector.shape_cast %68 : vector<1x1x8x128xf32> to vector<8x128xf32>
    %70 = vector.shape_cast %67 : vector<8x128xf32> to vector<1x1x8x128xf32>
    tpu.vector_store %arg5[%c0_55, %c5_56, %c0_57, %c0_58], %70 {strides = array<i32>} : memref<1x18x8x128xf32, #tpu.memory_space<vmem>>, vector<1x1x8x128xf32>,
    %c0_59 = arith.constant 0 : index
    %c2_60 = arith.constant 2 : index
    %c0_61 = arith.constant 0 : index
    %c0_62 = arith.constant 0 : index
    %71 = vector.load %arg3[%c0_59, %c2_60, %c0_61, %c0_62] : memref<1x4x32x128xf32, #tpu.memory_space<vmem>>, vector<1x1x32x128xf32>
    %72 = vector.shape_cast %71 : vector<1x1x32x128xf32> to vector<32x128xf32>
    %c2_i32 = arith.constant 2 : i32
    %73 = vector.broadcast %c2_i32 : i32 to vector<32x128xi32>
    %74 = arith.cmpi eq, %4, %73 : vector<32x128xi32>
    %75 = arith.extui %74 : vector<32x128xi1> to vector<32x128xi32>
    %76 = arith.sitofp %75 : vector<32x128xi32> to vector<32x128xf32>
    %cst_63 = arith.constant 1.000000e+00 : f32
    %77 = vector.broadcast %cst_63 : f32 to vector<32x128xf32>
    %78 = arith.subf %77, %72 : vector<32x128xf32>
    %cst_64 = arith.constant 1.000000e-10 : f32
    %cst_65 = arith.constant 1.000000e+00 : f32
    %79 = vector.broadcast %cst_64 : f32 to vector<32x128xf32>
    %80 = arith.maximumf %79, %78 : vector<32x128xf32>
    %81 = vector.broadcast %cst_65 : f32 to vector<32x128xf32>
    %82 = arith.minimumf %81, %80 : vector<32x128xf32>
    %83 = arith.select %74, %72, %82 : vector<32x128xi1>, vector<32x128xf32>
    %84 = math.log %83 : vector<32x128xf32>
    %c0_66 = arith.constant 0 : index
    %c6 = arith.constant 6 : index
    %c0_67 = arith.constant 0 : index
    %c0_68 = arith.constant 0 : index
    %85 = vector.load %arg5[%c0_66, %c6, %c0_67, %c0_68] : memref<1x18x8x128xf32, #tpu.memory_space<vmem>>, vector<1x1x8x128xf32>
    %86 = vector.shape_cast %85 : vector<1x1x8x128xf32> to vector<8x128xf32>
    %87 = vector.shape_cast %76 : vector<32x128xf32> to vector<4x8x128xf32>
    %cst_69 = arith.constant dense<0.000000e+00> : vector<8x128xf32>
    %88 = vector.multi_reduction <add>, %87, %cst_69 [0] : vector<4x8x128xf32> to vector<8x128xf32>
    %89 = arith.addf %86, %88 : vector<8x128xf32>
    %c0_70 = arith.constant 0 : index
    %c6_71 = arith.constant 6 : index
    %c0_72 = arith.constant 0 : index
    %c0_73 = arith.constant 0 : index
    %90 = vector.load %arg5[%c0_70, %c6_71, %c0_72, %c0_73] : memref<1x18x8x128xf32, #tpu.memory_space<vmem>>, vector<1x1x8x128xf32>
    %91 = vector.shape_cast %90 : vector<1x1x8x128xf32> to vector<8x128xf32>
    %92 = vector.shape_cast %89 : vector<8x128xf32> to vector<1x1x8x128xf32>
    tpu.vector_store %arg5[%c0_70, %c6_71, %c0_72, %c0_73], %92 {strides = array<i32>} : memref<1x18x8x128xf32, #tpu.memory_space<vmem>>, vector<1x1x8x128xf32>,
    %c0_74 = arith.constant 0 : index
    %c7 = arith.constant 7 : index
    %c0_75 = arith.constant 0 : index
    %c0_76 = arith.constant 0 : index
    %93 = vector.load %arg5[%c0_74, %c7, %c0_75, %c0_76] : memref<1x18x8x128xf32, #tpu.memory_space<vmem>>, vector<1x1x8x128xf32>
    %94 = vector.shape_cast %93 : vector<1x1x8x128xf32> to vector<8x128xf32>
    %95 = vector.shape_cast %84 : vector<32x128xf32> to vector<4x8x128xf32>
    %cst_77 = arith.constant dense<0.000000e+00> : vector<8x128xf32>
    %96 = vector.multi_reduction <add>, %95, %cst_77 [0] : vector<4x8x128xf32> to vector<8x128xf32>
    %97 = arith.addf %94, %96 : vector<8x128xf32>
    %c0_78 = arith.constant 0 : index
    %c7_79 = arith.constant 7 : index
    %c0_80 = arith.constant 0 : index
    %c0_81 = arith.constant 0 : index
    %98 = vector.load %arg5[%c0_78, %c7_79, %c0_80, %c0_81] : memref<1x18x8x128xf32, #tpu.memory_space<vmem>>, vector<1x1x8x128xf32>
    %99 = vector.shape_cast %98 : vector<1x1x8x128xf32> to vector<8x128xf32>
    %100 = vector.shape_cast %97 : vector<8x128xf32> to vector<1x1x8x128xf32>
    tpu.vector_store %arg5[%c0_78, %c7_79, %c0_80, %c0_81], %100 {strides = array<i32>} : memref<1x18x8x128xf32, #tpu.memory_space<vmem>>, vector<1x1x8x128xf32>,
    %c0_82 = arith.constant 0 : index
    %c8 = arith.constant 8 : index
    %c0_83 = arith.constant 0 : index
    %c0_84 = arith.constant 0 : index
    %101 = vector.load %arg5[%c0_82, %c8, %c0_83, %c0_84] : memref<1x18x8x128xf32, #tpu.memory_space<vmem>>, vector<1x1x8x128xf32>
    %102 = vector.shape_cast %101 : vector<1x1x8x128xf32> to vector<8x128xf32>
    %103 = arith.mulf %72, %76 : vector<32x128xf32>
    %104 = vector.shape_cast %103 : vector<32x128xf32> to vector<4x8x128xf32>
    %cst_85 = arith.constant dense<0.000000e+00> : vector<8x128xf32>
    %105 = vector.multi_reduction <add>, %104, %cst_85 [0] : vector<4x8x128xf32> to vector<8x128xf32>
    %106 = arith.addf %102, %105 : vector<8x128xf32>
    %c0_86 = arith.constant 0 : index
    %c8_87 = arith.constant 8 : index
    %c0_88 = arith.constant 0 : index
    %c0_89 = arith.constant 0 : index
    %107 = vector.load %arg5[%c0_86, %c8_87, %c0_88, %c0_89] : memref<1x18x8x128xf32, #tpu.memory_space<vmem>>, vector<1x1x8x128xf32>
    %108 = vector.shape_cast %107 : vector<1x1x8x128xf32> to vector<8x128xf32>
    %109 = vector.shape_cast %106 : vector<8x128xf32> to vector<1x1x8x128xf32>
    tpu.vector_store %arg5[%c0_86, %c8_87, %c0_88, %c0_89], %109 {strides = array<i32>} : memref<1x18x8x128xf32, #tpu.memory_space<vmem>>, vector<1x1x8x128xf32>,
    %c0_90 = arith.constant 0 : index
    %c9 = arith.constant 9 : index
    %c0_91 = arith.constant 0 : index
    %c0_92 = arith.constant 0 : index
    %110 = vector.load %arg5[%c0_90, %c9, %c0_91, %c0_92] : memref<1x18x8x128xf32, #tpu.memory_space<vmem>>, vector<1x1x8x128xf32>
    %111 = vector.shape_cast %110 : vector<1x1x8x128xf32> to vector<8x128xf32>
    %112 = vector.shape_cast %72 : vector<32x128xf32> to vector<4x8x128xf32>
    %cst_93 = arith.constant dense<0.000000e+00> : vector<8x128xf32>
    %113 = vector.multi_reduction <add>, %112, %cst_93 [0] : vector<4x8x128xf32> to vector<8x128xf32>
    %114 = arith.addf %111, %113 : vector<8x128xf32>
    %c0_94 = arith.constant 0 : index
    %c9_95 = arith.constant 9 : index
    %c0_96 = arith.constant 0 : index
    %c0_97 = arith.constant 0 : index
    %115 = vector.load %arg5[%c0_94, %c9_95, %c0_96, %c0_97] : memref<1x18x8x128xf32, #tpu.memory_space<vmem>>, vector<1x1x8x128xf32>
    %116 = vector.shape_cast %115 : vector<1x1x8x128xf32> to vector<8x128xf32>
    %117 = vector.shape_cast %114 : vector<8x128xf32> to vector<1x1x8x128xf32>
    tpu.vector_store %arg5[%c0_94, %c9_95, %c0_96, %c0_97], %117 {strides = array<i32>} : memref<1x18x8x128xf32, #tpu.memory_space<vmem>>, vector<1x1x8x128xf32>,
    %c0_98 = arith.constant 0 : index
    %c10 = arith.constant 10 : index
    %c0_99 = arith.constant 0 : index
    %c0_100 = arith.constant 0 : index
    %118 = vector.load %arg5[%c0_98, %c10, %c0_99, %c0_100] : memref<1x18x8x128xf32, #tpu.memory_space<vmem>>, vector<1x1x8x128xf32>
    %119 = vector.shape_cast %118 : vector<1x1x8x128xf32> to vector<8x128xf32>
    %cst_101 = arith.constant 1.000000e+00 : f32
    %120 = vector.broadcast %cst_101 : f32 to vector<32x128xf32>
    %121 = arith.subf %120, %76 : vector<32x128xf32>
    %122 = arith.mulf %82, %121 : vector<32x128xf32>
    %123 = vector.shape_cast %122 : vector<32x128xf32> to vector<4x8x128xf32>
    %cst_102 = arith.constant dense<0.000000e+00> : vector<8x128xf32>
    %124 = vector.multi_reduction <add>, %123, %cst_102 [0] : vector<4x8x128xf32> to vector<8x128xf32>
    %125 = arith.addf %119, %124 : vector<8x128xf32>
    %c0_103 = arith.constant 0 : index
    %c10_104 = arith.constant 10 : index
    %c0_105 = arith.constant 0 : index
    %c0_106 = arith.constant 0 : index
    %126 = vector.load %arg5[%c0_103, %c10_104, %c0_105, %c0_106] : memref<1x18x8x128xf32, #tpu.memory_space<vmem>>, vector<1x1x8x128xf32>
    %127 = vector.shape_cast %126 : vector<1x1x8x128xf32> to vector<8x128xf32>
    %128 = vector.shape_cast %125 : vector<8x128xf32> to vector<1x1x8x128xf32>
    tpu.vector_store %arg5[%c0_103, %c10_104, %c0_105, %c0_106], %128 {strides = array<i32>} : memref<1x18x8x128xf32, #tpu.memory_space<vmem>>, vector<1x1x8x128xf32>,
    %c0_107 = arith.constant 0 : index
    %c11 = arith.constant 11 : index
    %c0_108 = arith.constant 0 : index
    %c0_109 = arith.constant 0 : index
    %129 = vector.load %arg5[%c0_107, %c11, %c0_108, %c0_109] : memref<1x18x8x128xf32, #tpu.memory_space<vmem>>, vector<1x1x8x128xf32>
    %130 = vector.shape_cast %129 : vector<1x1x8x128xf32> to vector<8x128xf32>
    %131 = vector.shape_cast %82 : vector<32x128xf32> to vector<4x8x128xf32>
    %cst_110 = arith.constant dense<0.000000e+00> : vector<8x128xf32>
    %132 = vector.multi_reduction <add>, %131, %cst_110 [0] : vector<4x8x128xf32> to vector<8x128xf32>
    %133 = arith.addf %130, %132 : vector<8x128xf32>
    %c0_111 = arith.constant 0 : index
    %c11_112 = arith.constant 11 : index
    %c0_113 = arith.constant 0 : index
    %c0_114 = arith.constant 0 : index
    %134 = vector.load %arg5[%c0_111, %c11_112, %c0_113, %c0_114] : memref<1x18x8x128xf32, #tpu.memory_space<vmem>>, vector<1x1x8x128xf32>
    %135 = vector.shape_cast %134 : vector<1x1x8x128xf32> to vector<8x128xf32>
    %136 = vector.shape_cast %133 : vector<8x128xf32> to vector<1x1x8x128xf32>
    tpu.vector_store %arg5[%c0_111, %c11_112, %c0_113, %c0_114], %136 {strides = array<i32>} : memref<1x18x8x128xf32, #tpu.memory_space<vmem>>, vector<1x1x8x128xf32>,
    %c0_115 = arith.constant 0 : index
    %c3_116 = arith.constant 3 : index
    %c0_117 = arith.constant 0 : index
    %c0_118 = arith.constant 0 : index
    %137 = vector.load %arg3[%c0_115, %c3_116, %c0_117, %c0_118] : memref<1x4x32x128xf32, #tpu.memory_space<vmem>>, vector<1x1x32x128xf32>
    %138 = vector.shape_cast %137 : vector<1x1x32x128xf32> to vector<32x128xf32>
    %c3_i32 = arith.constant 3 : i32
    %139 = vector.broadcast %c3_i32 : i32 to vector<32x128xi32>
    %140 = arith.cmpi eq, %4, %139 : vector<32x128xi32>
    %141 = arith.extui %140 : vector<32x128xi1> to vector<32x128xi32>
    %142 = arith.sitofp %141 : vector<32x128xi32> to vector<32x128xf32>
    %cst_119 = arith.constant 1.000000e+00 : f32
    %143 = vector.broadcast %cst_119 : f32 to vector<32x128xf32>
    %144 = arith.subf %143, %138 : vector<32x128xf32>
    %cst_120 = arith.constant 1.000000e-10 : f32
    %cst_121 = arith.constant 1.000000e+00 : f32
    %145 = vector.broadcast %cst_120 : f32 to vector<32x128xf32>
    %146 = arith.maximumf %145, %144 : vector<32x128xf32>
    %147 = vector.broadcast %cst_121 : f32 to vector<32x128xf32>
    %148 = arith.minimumf %147, %146 : vector<32x128xf32>
    %149 = arith.select %140, %138, %148 : vector<32x128xi1>, vector<32x128xf32>
    %150 = math.log %149 : vector<32x128xf32>
    %c0_122 = arith.constant 0 : index
    %c12 = arith.constant 12 : index
    %c0_123 = arith.constant 0 : index
    %c0_124 = arith.constant 0 : index
    %151 = vector.load %arg5[%c0_122, %c12, %c0_123, %c0_124] : memref<1x18x8x128xf32, #tpu.memory_space<vmem>>, vector<1x1x8x128xf32>
    %152 = vector.shape_cast %151 : vector<1x1x8x128xf32> to vector<8x128xf32>
    %153 = vector.shape_cast %142 : vector<32x128xf32> to vector<4x8x128xf32>
    %cst_125 = arith.constant dense<0.000000e+00> : vector<8x128xf32>
    %154 = vector.multi_reduction <add>, %153, %cst_125 [0] : vector<4x8x128xf32> to vector<8x128xf32>
    %155 = arith.addf %152, %154 : vector<8x128xf32>
    %c0_126 = arith.constant 0 : index
    %c12_127 = arith.constant 12 : index
    %c0_128 = arith.constant 0 : index
    %c0_129 = arith.constant 0 : index
    %156 = vector.load %arg5[%c0_126, %c12_127, %c0_128, %c0_129] : memref<1x18x8x128xf32, #tpu.memory_space<vmem>>, vector<1x1x8x128xf32>
    %157 = vector.shape_cast %156 : vector<1x1x8x128xf32> to vector<8x128xf32>
    %158 = vector.shape_cast %155 : vector<8x128xf32> to vector<1x1x8x128xf32>
    tpu.vector_store %arg5[%c0_126, %c12_127, %c0_128, %c0_129], %158 {strides = array<i32>} : memref<1x18x8x128xf32, #tpu.memory_space<vmem>>, vector<1x1x8x128xf32>,
    %c0_130 = arith.constant 0 : index
    %c13 = arith.constant 13 : index
    %c0_131 = arith.constant 0 : index
    %c0_132 = arith.constant 0 : index
    %159 = vector.load %arg5[%c0_130, %c13, %c0_131, %c0_132] : memref<1x18x8x128xf32, #tpu.memory_space<vmem>>, vector<1x1x8x128xf32>
    %160 = vector.shape_cast %159 : vector<1x1x8x128xf32> to vector<8x128xf32>
    %161 = vector.shape_cast %150 : vector<32x128xf32> to vector<4x8x128xf32>
    %cst_133 = arith.constant dense<0.000000e+00> : vector<8x128xf32>
    %162 = vector.multi_reduction <add>, %161, %cst_133 [0] : vector<4x8x128xf32> to vector<8x128xf32>
    %163 = arith.addf %160, %162 : vector<8x128xf32>
    %c0_134 = arith.constant 0 : index
    %c13_135 = arith.constant 13 : index
    %c0_136 = arith.constant 0 : index
    %c0_137 = arith.constant 0 : index
    %164 = vector.load %arg5[%c0_134, %c13_135, %c0_136, %c0_137] : memref<1x18x8x128xf32, #tpu.memory_space<vmem>>, vector<1x1x8x128xf32>
    %165 = vector.shape_cast %164 : vector<1x1x8x128xf32> to vector<8x128xf32>
    %166 = vector.shape_cast %163 : vector<8x128xf32> to vector<1x1x8x128xf32>
    tpu.vector_store %arg5[%c0_134, %c13_135, %c0_136, %c0_137], %166 {strides = array<i32>} : memref<1x18x8x128xf32, #tpu.memory_space<vmem>>, vector<1x1x8x128xf32>,
    %c0_138 = arith.constant 0 : index
    %c14 = arith.constant 14 : index
    %c0_139 = arith.constant 0 : index
    %c0_140 = arith.constant 0 : index
    %167 = vector.load %arg5[%c0_138, %c14, %c0_139, %c0_140] : memref<1x18x8x128xf32, #tpu.memory_space<vmem>>, vector<1x1x8x128xf32>
    %168 = vector.shape_cast %167 : vector<1x1x8x128xf32> to vector<8x128xf32>
    %169 = arith.mulf %138, %142 : vector<32x128xf32>
    %170 = vector.shape_cast %169 : vector<32x128xf32> to vector<4x8x128xf32>
    %cst_141 = arith.constant dense<0.000000e+00> : vector<8x128xf32>
    %171 = vector.multi_reduction <add>, %170, %cst_141 [0] : vector<4x8x128xf32> to vector<8x128xf32>
    %172 = arith.addf %168, %171 : vector<8x128xf32>
    %c0_142 = arith.constant 0 : index
    %c14_143 = arith.constant 14 : index
    %c0_144 = arith.constant 0 : index
    %c0_145 = arith.constant 0 : index
    %173 = vector.load %arg5[%c0_142, %c14_143, %c0_144, %c0_145] : memref<1x18x8x128xf32, #tpu.memory_space<vmem>>, vector<1x1x8x128xf32>
    %174 = vector.shape_cast %173 : vector<1x1x8x128xf32> to vector<8x128xf32>
    %175 = vector.shape_cast %172 : vector<8x128xf32> to vector<1x1x8x128xf32>
    tpu.vector_store %arg5[%c0_142, %c14_143, %c0_144, %c0_145], %175 {strides = array<i32>} : memref<1x18x8x128xf32, #tpu.memory_space<vmem>>, vector<1x1x8x128xf32>,
    %c0_146 = arith.constant 0 : index
    %c15 = arith.constant 15 : index
    %c0_147 = arith.constant 0 : index
    %c0_148 = arith.constant 0 : index
    %176 = vector.load %arg5[%c0_146, %c15, %c0_147, %c0_148] : memref<1x18x8x128xf32, #tpu.memory_space<vmem>>, vector<1x1x8x128xf32>
    %177 = vector.shape_cast %176 : vector<1x1x8x128xf32> to vector<8x128xf32>
    %178 = vector.shape_cast %138 : vector<32x128xf32> to vector<4x8x128xf32>
    %cst_149 = arith.constant dense<0.000000e+00> : vector<8x128xf32>
    %179 = vector.multi_reduction <add>, %178, %cst_149 [0] : vector<4x8x128xf32> to vector<8x128xf32>
    %180 = arith.addf %177, %179 : vector<8x128xf32>
    %c0_150 = arith.constant 0 : index
    %c15_151 = arith.constant 15 : index
    %c0_152 = arith.constant 0 : index
    %c0_153 = arith.constant 0 : index
    %181 = vector.load %arg5[%c0_150, %c15_151, %c0_152, %c0_153] : memref<1x18x8x128xf32, #tpu.memory_space<vmem>>, vector<1x1x8x128xf32>
    %182 = vector.shape_cast %181 : vector<1x1x8x128xf32> to vector<8x128xf32>
    %183 = vector.shape_cast %180 : vector<8x128xf32> to vector<1x1x8x128xf32>
    tpu.vector_store %arg5[%c0_150, %c15_151, %c0_152, %c0_153], %183 {strides = array<i32>} : memref<1x18x8x128xf32, #tpu.memory_space<vmem>>, vector<1x1x8x128xf32>,
    %c0_154 = arith.constant 0 : index
    %c16 = arith.constant 16 : index
    %c0_155 = arith.constant 0 : index
    %c0_156 = arith.constant 0 : index
    %184 = vector.load %arg5[%c0_154, %c16, %c0_155, %c0_156] : memref<1x18x8x128xf32, #tpu.memory_space<vmem>>, vector<1x1x8x128xf32>
    %185 = vector.shape_cast %184 : vector<1x1x8x128xf32> to vector<8x128xf32>
    %cst_157 = arith.constant 1.000000e+00 : f32
    %186 = vector.broadcast %cst_157 : f32 to vector<32x128xf32>
    %187 = arith.subf %186, %142 : vector<32x128xf32>
    %188 = arith.mulf %148, %187 : vector<32x128xf32>
    %189 = vector.shape_cast %188 : vector<32x128xf32> to vector<4x8x128xf32>
    %cst_158 = arith.constant dense<0.000000e+00> : vector<8x128xf32>
    %190 = vector.multi_reduction <add>, %189, %cst_158 [0] : vector<4x8x128xf32> to vector<8x128xf32>
    %191 = arith.addf %185, %190 : vector<8x128xf32>
    %c0_159 = arith.constant 0 : index
    %c16_160 = arith.constant 16 : index
    %c0_161 = arith.constant 0 : index
    %c0_162 = arith.constant 0 : index
    %192 = vector.load %arg5[%c0_159, %c16_160, %c0_161, %c0_162] : memref<1x18x8x128xf32, #tpu.memory_space<vmem>>, vector<1x1x8x128xf32>
    %193 = vector.shape_cast %192 : vector<1x1x8x128xf32> to vector<8x128xf32>
    %194 = vector.shape_cast %191 : vector<8x128xf32> to vector<1x1x8x128xf32>
    tpu.vector_store %arg5[%c0_159, %c16_160, %c0_161, %c0_162], %194 {strides = array<i32>} : memref<1x18x8x128xf32, #tpu.memory_space<vmem>>, vector<1x1x8x128xf32>,
    %c0_163 = arith.constant 0 : index
    %c17 = arith.constant 17 : index
    %c0_164 = arith.constant 0 : index
    %c0_165 = arith.constant 0 : index
    %195 = vector.load %arg5[%c0_163, %c17, %c0_164, %c0_165] : memref<1x18x8x128xf32, #tpu.memory_space<vmem>>, vector<1x1x8x128xf32>
    %196 = vector.shape_cast %195 : vector<1x1x8x128xf32> to vector<8x128xf32>
    %197 = vector.shape_cast %148 : vector<32x128xf32> to vector<4x8x128xf32>
    %cst_166 = arith.constant dense<0.000000e+00> : vector<8x128xf32>
    %198 = vector.multi_reduction <add>, %197, %cst_166 [0] : vector<4x8x128xf32> to vector<8x128xf32>
    %199 = arith.addf %196, %198 : vector<8x128xf32>
    %c0_167 = arith.constant 0 : index
    %c17_168 = arith.constant 17 : index
    %c0_169 = arith.constant 0 : index
    %c0_170 = arith.constant 0 : index
    %200 = vector.load %arg5[%c0_167, %c17_168, %c0_169, %c0_170] : memref<1x18x8x128xf32, #tpu.memory_space<vmem>>, vector<1x1x8x128xf32>
    %201 = vector.shape_cast %200 : vector<1x1x8x128xf32> to vector<8x128xf32>
    %202 = vector.shape_cast %199 : vector<8x128xf32> to vector<1x1x8x128xf32>
    tpu.vector_store %arg5[%c0_167, %c17_168, %c0_169, %c0_170], %202 {strides = array<i32>} : memref<1x18x8x128xf32, #tpu.memory_space<vmem>>, vector<1x1x8x128xf32>,
    return
  }
  func.func @transform_0(%arg0: i32, %arg1: i32, %arg2: i32) -> (i32, i32, i32, i32) {
    %c2_i32 = arith.constant 2 : i32
    %0 = arith.muli %arg1, %c2_i32 : i32
    %1 = arith.addi %0, %arg2 : i32
    %c0_i32 = arith.constant 0 : i32
    %c0_i32_0 = arith.constant 0 : i32
    %c0_i32_1 = arith.constant 0 : i32
    return %arg0, %c0_i32, %1, %c0_i32_0 : i32, i32, i32, i32
  }
  func.func @transform_1(%arg0: i32, %arg1: i32, %arg2: i32) -> (i32, i32, i32) {
    %c2_i32 = arith.constant 2 : i32
    %0 = arith.muli %arg1, %c2_i32 : i32
    %1 = arith.addi %0, %arg2 : i32
    %c0_i32 = arith.constant 0 : i32
    %c0_i32_0 = arith.constant 0 : i32
    return %arg0, %1, %c0_i32 : i32, i32, i32
  }
  func.func @transform_2(%arg0: i32, %arg1: i32, %arg2: i32) -> (i32, i32, i32, i32) {
    %c2_i32 = arith.constant 2 : i32
    %0 = arith.muli %arg0, %c2_i32 : i32
    %1 = arith.addi %0, %arg1 : i32
    %c0_i32 = arith.constant 0 : i32
    %c0_i32_0 = arith.constant 0 : i32
    %c0_i32_1 = arith.constant 0 : i32
    %c0_i32_2 = arith.constant 0 : i32
    return %1, %c0_i32, %c0_i32_0, %c0_i32_1 : i32, i32, i32, i32
  }
}

</mosaic_0001>

<llo_original>
// kernel: tpu_custom_call.1
$region0: #{tpu_custom_call.1}
  #allocation0 [shape = 'u32[]', space=smem, size = 0x4, offset = 0x4, fixed_abs, tag = 'smem constant byte address 0x4 - core index']
  #allocation1 [shape = 'u32[144,128]{1,0:T(1,128)}', space=vmem, size = 0x12000, scoped, tag = 'internal scratch']
  #allocation8 [shape = 's32[]', space=sflag, size = 0x4, offset = 0, fixed_abs, tag = 'sflag constant byte address 0x0 - dummy sync flag']
  %s0 = inlined_call_operand.hbm [shape: f32[2,4,128,128], index: 0, kind: input, shape index: {}]
  %s1 = inlined_call_operand.hbm [shape: s32[2,128,128], index: 1, kind: input, shape index: {}]
  %s2 = inlined_call_operand.hbm [shape: f32[4,18,8,128], index: 2, kind: output, shape index: {}]
  %s3 = sld [smem:[#allocation0]]
  $region53: #{tpu_custom_call.1} parent=0
    _
  %s5 = ssub.s32 1, %s3
  %s6 = scalar_select 0, %s5, %s3
  $region1: #{tpu_custom_call.1} parent=0
    #allocation2 [shape = 'u8[131072]{0}', space=vmem, size = 0x20000, scoped, tag = 'input window, operand 0']
    #allocation3 [shape = 's32[2]{0}', space=sflag, size = 0x8, scoped, tag = 'scoped memory for tpu_custom_call.1']
    #allocation4 [shape = 's32[2]{0}', space=sflag, size = 0x8, scoped, tag = 'scoped memory for tpu_custom_call.1']
    #allocation5 [shape = 'u8[32768]{0}', space=vmem, size = 0x8000, scoped, tag = 'input window, operand 1']
    #allocation6 [shape = 's32[2]{0}', space=sflag, size = 0x8, scoped, tag = 'scoped memory for tpu_custom_call.1']
    #allocation7 [shape = 'u8[147456]{0}', space=vmem, size = 0x24000, scoped, tag = 'output window, operand 0']
    %7 = vsyncpa [#allocation3], 0
    %s8 = scalar_lea.sflag [#allocation3], 1
    %9 = vsyncpa %s8, 0
    %10 = vsyncpa [#allocation6], 0
    %s11 = scalar_lea.sflag [#allocation6], 1
    %12 = vsyncpa %s11, 0
    %13 = vsyncpa [#allocation4], 0
    %s14 = scalar_lea.sflag [#allocation4], 1
    %15 = vsyncpa %s14, 0
    loop: start=0, step=1, limit=10
    $region2: #{tpu_custom_call.1} parent=1 // loop_pre_header
      _
    $region3: #{tpu_custom_call.1} parent=1 // loop_header
      %s17 = sphi 0, %s21
      %p18 = scmp.ge.s32.totalorder %s17, 10
      %s24 = sphi 0, %s43
      %s25 = sphi 0, %s39
      %s26 = sphi 0, %s35
      %s27 = sphi 0, %s24
      %s28 = sphi 0, %s25
      %s29 = sphi 0, %s26
      %s30 = sphi 0, %s27
      %s31 = sphi 0, %s28
      %s32 = sphi 0, %s29
      %s52 = sphi 0, %s54
      %s55 = sphi 0, %s52
      %s56 = sphi 0, %s55
      %s72 = sphi 0, %s56
      %s84 = sphi 0, %s86
      %s87 = sphi 0, %s84
      %s88 = sphi 0, %s87
      %s104 = sphi 0, %s88
      %s114 = sphi 0, %s116
      %s117 = sphi 0, %s114
      %s118 = sphi 0, %s117
      %s134 = sphi 0, %s118
    $region4: #{tpu_custom_call.1} parent=1 // loop_header_branch
      %20 = sbr.rel (%p18) target = $region8
    $region5: #{tpu_custom_call.1} parent=1 // loop_body
      %s22 = ssub.s32 %s17, 1
      %s23 = ssub.s32 %s17, 2
      %s33 = sadd.s32 1, %s26
      %p34 = scmp.ge.s32.totalorder %s33, 2
      %s35 = scalar_select %p34, 0, %s33
      %s36 = sadd.s32 1, %s25
      %s37 = scalar_select %p34, %s36, %s25
      %p38 = scmp.ge.s32.totalorder %s37, 2
      %s39 = scalar_select %p38, 0, %s37
      %s40 = sadd.s32 1, %s24
      %s41 = scalar_select %p38, %s40, %s24
      %p42 = scmp.ge.s32.totalorder %s41, 2
      %s43 = scalar_select %p42, 0, %s41
      %s44 = smul.u32 %s25, 2
      %s45 = sadd.s32 %s44, %s26
      %s46 = smul.u32 %s39, 2
      %s47 = sadd.s32 %s46, %s35
      %s48 = ssub.s32 %s24, %s43
      %s49 = ssub.s32 %s45, %s47
      %s50 = sor.u32 %s48, %s49
      %p51 = scmp.eq.s32.totalorder %s50, 0
      %s53 = sadd.s32 %s52, 1
      %s54 = scalar_select %p51, %s52, %s53
      %p57 = pneg %p51
      %p58 = scmp.eq.s32.totalorder %s17, 7
      %p59 = por %p57, %p58
      %p60 = scmp.ne.s32.totalorder %s52, %s55
      %p61 = scmp.eq.s32.totalorder %s17, 0
      %p62 = por %p60, %p61
      %p63 = scmp.ne.s32.totalorder %s52, %s55
      %p64 = scmp.eq.s32.totalorder %s22, 7
      %p65 = por %p63, %p64
      %p66 = scmp.ne.s32.totalorder %s55, %s56
      %p67 = scmp.eq.s32.totalorder %s22, 0
      %p68 = por %p66, %p67
      %p69 = scmp.ne.s32.totalorder %s55, %s56
      %p70 = scmp.eq.s32.totalorder %s23, 7
      %p71 = por %p69, %p70
      %p73 = scmp.ne.s32.totalorder %s56, %s72
      %p74 = scmp.eq.s32.totalorder %s23, 0
      %p75 = por %p73, %p74
      %s76 = smul.u32 %s25, 2
      %s77 = sadd.s32 %s76, %s26
      %s78 = smul.u32 %s39, 2
      %s79 = sadd.s32 %s78, %s35
      %s80 = ssub.s32 %s24, %s43
      %s81 = ssub.s32 %s77, %s79
      %s82 = sor.u32 %s80, %s81
      %p83 = scmp.eq.s32.totalorder %s82, 0
      %s85 = sadd.s32 %s84, 1
      %s86 = scalar_select %p83, %s84, %s85
      %p89 = pneg %p83
      %p90 = scmp.eq.s32.totalorder %s17, 7
      %p91 = por %p89, %p90
      %p92 = scmp.ne.s32.totalorder %s84, %s87
      %p93 = scmp.eq.s32.totalorder %s17, 0
      %p94 = por %p92, %p93
      %p95 = scmp.ne.s32.totalorder %s84, %s87
      %p96 = scmp.eq.s32.totalorder %s22, 7
      %p97 = por %p95, %p96
      %p98 = scmp.ne.s32.totalorder %s87, %s88
      %p99 = scmp.eq.s32.totalorder %s22, 0
      %p100 = por %p98, %p99
      %p101 = scmp.ne.s32.totalorder %s87, %s88
      %p102 = scmp.eq.s32.totalorder %s23, 7
      %p103 = por %p101, %p102
      %p105 = scmp.ne.s32.totalorder %s88, %s104
      %p106 = scmp.eq.s32.totalorder %s23, 0
      %p107 = por %p105, %p106
      %s108 = smul.u32 %s24, 2
      %s109 = sadd.s32 %s108, %s25
      %s110 = smul.u32 %s43, 2
      %s111 = sadd.s32 %s110, %s39
      %s112 = ssub.s32 %s109, %s111
      %p113 = scmp.eq.s32.totalorder %s112, 0
      %s115 = sadd.s32 %s114, 1
      %s116 = scalar_select %p113, %s114, %s115
      %p119 = pneg %p113
      %p120 = scmp.eq.s32.totalorder %s17, 7
      %p121 = por %p119, %p120
      %p122 = scmp.ne.s32.totalorder %s114, %s117
      %p123 = scmp.eq.s32.totalorder %s17, 0
      %p124 = por %p122, %p123
      %p125 = scmp.ne.s32.totalorder %s114, %s117
      %p126 = scmp.eq.s32.totalorder %s22, 7
      %p127 = por %p125, %p126
      %p128 = scmp.ne.s32.totalorder %s117, %s118
      %p129 = scmp.eq.s32.totalorder %s22, 0
      %p130 = por %p128, %p129
      %p131 = scmp.ne.s32.totalorder %s117, %s118
      %p132 = scmp.eq.s32.totalorder %s23, 7
      %p133 = por %p131, %p132
      %p135 = scmp.ne.s32.totalorder %s118, %s134
      %p136 = scmp.eq.s32.totalorder %s23, 0
      %p137 = por %p135, %p136
      %p138 = scmp.le.s32.totalorder 1, %s17
      %p139 = scmp.lt.s32.totalorder %s17, 9
      %p140 = pnand %p138, %p139
      %p141 = pneg %p140
      // Predicated region
      $region9: #{tpu_custom_call.1} parent=5 // pred_check
        _
      $region10: #{tpu_custom_call.1} parent=5 // pred_check_branch
        %143 = sbr.rel (%p140) target = $region12
      $region11: #{tpu_custom_call.1} parent=5 // pred_region
        %s144 = ssub.s32 %s17, 1
      $region12: #{tpu_custom_call.1} parent=5 // pred_fallthru
        _
      %p145 = scmp.lt.s32.totalorder %s17, 8
      // Predicated region
      $region13: #{tpu_custom_call.1} parent=5 // pred_check
        %p146 = pneg %p145
      $region14: #{tpu_custom_call.1} parent=5 // pred_check_branch
        %148 = sbr.rel (%p146) target = $region16
      $region15: #{tpu_custom_call.1} parent=5 // pred_region
        // Predicated region
        $region17: #{tpu_custom_call.1} parent=15 // pred_check
          %p149 = pneg %p62
        $region18: #{tpu_custom_call.1} parent=15 // pred_check_branch
          %151 = sbr.rel (%p149) target = $region20
        $region19: #{tpu_custom_call.1} parent=15 // pred_region
          #allocation9 [shape = 'u32[6]{0}', space=smem, size = 0x18, scoped, tag = 'DMA stride descriptor']
          %s152 = sand.u32 %s52, 1
          %s153 = scalar_lea.sflag [#allocation3], %s152
          %s154 = sand.u32 %s52, 1
          %s155 = smul.addr %s154, 128
          %s156 = scalar_lea.vmem [#allocation2], %s155
          %s157 = smul.u32 %s25, 2
          %s158 = sadd.s32 %s157, %s26
          %s159 = smul.u32 4, %s158
          %s161 = ssub.s32 2048, 2048
          %162 = vsyncadd %s153, %s161
          %s163 = smul.addr %s24, 64
          %s164 = sadd.s32 %s159, %s163
          %s165 = smul.addr %s164, 128
          %s166 = scalar_lea.hbm %s0, %s165
          %s168 = sshll.u32 1, 14
          %s169 = sxor.u32 4294967295, %s168
          %s171 = sld [smem:[#allocation0]]
          %s172 = sadd.s32 2, %s171
          %s174 = sshll.u32 7, 26
          %s175 = sxor.u32 4294967295, %s174
          %s176 = sand.u32 0, %s175
          %s177 = sshll.u32 %s172, 26
          %s178 = sor.u32 %s176, %s177
          %s179 = sshll.u32 %s156, 4
          %s180 = int_to_ptr.vmem [resolvable:$true] %s179
          %186 = sst [smem:[#allocation9]] 2048
          %s187 = scalar_lea.smem [#allocation9], 1
          %188 = sst [smem:[%s187]] 512
          %s189 = scalar_lea.smem [#allocation9], 2
          %190 = sst [smem:[%s189]] 4
          %s191 = scalar_lea.smem [#allocation9], 3
          %192 = sst [smem:[%s191]] 128
          %s193 = scalar_lea.smem [#allocation9], 4
          %194 = sst [smem:[%s193]] 128
          %s195 = scalar_lea.smem [#allocation9], 5
          %196 = sst [smem:[%s195]] 8
          %198 = dma.general %s166, 2048, %s180, %s153, [#allocation8], [#allocation9], %s178, 0
        $region20: #{tpu_custom_call.1} parent=15 // pred_fallthru
          _
        // Predicated region
        $region21: #{tpu_custom_call.1} parent=15 // pred_check
          %p199 = pneg %p94
        $region22: #{tpu_custom_call.1} parent=15 // pred_check_branch
          %201 = sbr.rel (%p199) target = $region24
        $region23: #{tpu_custom_call.1} parent=15 // pred_region
          %s202 = sand.u32 %s84, 1
          %s203 = scalar_lea.sflag [#allocation6], %s202
          %s204 = sand.u32 %s84, 1
          %s205 = smul.addr %s204, 32
          %s206 = scalar_lea.vmem [#allocation5], %s205
          %s207 = smul.u32 %s25, 2
          %s208 = sadd.s32 %s207, %s26
          %s209 = smul.u32 4, %s208
          %s211 = ssub.s32 512, 512
          %212 = vsyncadd %s203, %s211
          %s213 = smul.addr %s24, 16
          %s214 = sadd.s32 %s209, %s213
          %s215 = smul.addr %s214, 128
          %s216 = scalar_lea.hbm %s1, %s215
          %s217 = sshll.u32 %s206, 4
          %s218 = int_to_ptr.vmem [resolvable:$true] %s217
          %223 = dma.hbm_to_vmem [thread:$0]  %s216, 512, %s218, %s203, 128, 128, 8
        $region24: #{tpu_custom_call.1} parent=15 // pred_fallthru
          _
      $region16: #{tpu_custom_call.1} parent=5 // pred_fallthru
        _
      %p224 = scmp.le.s32.totalorder 1, %s17
      %p225 = scmp.lt.s32.totalorder %s17, 9
      %p226 = pnand %p224, %p225
      %p227 = pneg %p226
      // Predicated region
      $region25: #{tpu_custom_call.1} parent=5 // pred_check
        _
      $region26: #{tpu_custom_call.1} parent=5 // pred_check_branch
        %229 = sbr.rel (%p226) target = $region28
      $region27: #{tpu_custom_call.1} parent=5 // pred_region
        %s230 = ssub.s32 %s17, 1
        %s231 = sand.u32 %s55, 1
        %s232 = scalar_lea.sflag [#allocation3], %s231
        %s233 = sand.u32 %s55, 1
        %s234 = smul.addr %s233, 128
        %s235 = scalar_lea.vmem [#allocation2], %s234
        // Predicated region
        $region29: #{tpu_custom_call.1} parent=27 // pred_check
          %p236 = pneg %p68
        $region30: #{tpu_custom_call.1} parent=27 // pred_check_branch
          %238 = sbr.rel (%p236) target = $region32
        $region31: #{tpu_custom_call.1} parent=27 // pred_region
          %239 = dma.done %s232, 2048
        $region32: #{tpu_custom_call.1} parent=27 // pred_fallthru
          _
        %s240 = sand.u32 %s87, 1
        %s241 = scalar_lea.sflag [#allocation6], %s240
        %s242 = sand.u32 %s87, 1
        %s243 = smul.addr %s242, 32
        %s244 = scalar_lea.vmem [#allocation5], %s243
        // Predicated region
        $region33: #{tpu_custom_call.1} parent=27 // pred_check
          %p245 = pneg %p100
        $region34: #{tpu_custom_call.1} parent=27 // pred_check_branch
          %247 = sbr.rel (%p245) target = $region36
        $region35: #{tpu_custom_call.1} parent=27 // pred_region
          %248 = dma.done %s241, 512
        $region36: #{tpu_custom_call.1} parent=27 // pred_fallthru
          _
        %s249 = sand.u32 %s55, 1
        %s250 = scalar_lea.sflag [#allocation3], %s249
        %s251 = sand.u32 %s55, 1
        %s252 = smul.addr %s251, 128
        %s253 = scalar_lea.vmem [#allocation2], %s252
        %p254 = pneg %p68
        %p255 = pneg %p65
        %s256 = sand.u32 %s87, 1
        %s257 = scalar_lea.sflag [#allocation6], %s256
        %s258 = sand.u32 %s87, 1
        %s259 = smul.addr %s258, 32
        %s260 = scalar_lea.vmem [#allocation5], %s259
        %p261 = pneg %p100
        %p262 = pneg %p97
        %p263 = pneg %p130
        %p264 = pneg %p127
        %s265 = sand.u32 %s117, 1
        %s266 = scalar_lea.sflag [#allocation4], %s265
        %s267 = sand.u32 %s117, 1
        %s268 = smul.addr %s267, 144
        %s269 = scalar_lea.vmem [#allocation7], %s268
        %s270 = smul.u32 %s28, 2
        %s271 = sadd.s32 %s270, %s29
        %s272 = smul.u32 4, %s271
        %s273 = smul.u32 %s28, 2
        %s274 = sadd.s32 %s273, %s29
        %s275 = smul.u32 4, %s274
        %s276 = smul.u32 %s27, 2
        %s277 = sadd.s32 %s276, %s28
        %p278 = scmp.eq.s32.totalorder %s29, 0
        // Predicated region
        $region37: #{tpu_custom_call.1} parent=27 // pred_check
          %p279 = pneg %p278
        $region38: #{tpu_custom_call.1} parent=27 // pred_check_branch
          %281 = sbr.rel (%p279) target = $region40
        $region39: #{tpu_custom_call.1} parent=27 // pred_region
          %282 = vst [vmem:[%s269] sm:$0xff] 0.0
          %283 = vst [vmem:[%s269 + $0x8] sm:$0xff] 0.0
          %284 = vst [vmem:[%s269 + $0x10] sm:$0xff] 0.0
          %285 = vst [vmem:[%s269 + $0x18] sm:$0xff] 0.0
          %286 = vst [vmem:[%s269 + $0x20] sm:$0xff] 0.0
          %287 = vst [vmem:[%s269 + $0x28] sm:$0xff] 0.0
          %288 = vst [vmem:[%s269 + $0x30] sm:$0xff] 0.0
          %289 = vst [vmem:[%s269 + $0x38] sm:$0xff] 0.0
          %290 = vst [vmem:[%s269 + $0x40] sm:$0xff] 0.0
          %291 = vst [vmem:[%s269 + $0x48] sm:$0xff] 0.0
          %292 = vst [vmem:[%s269 + $0x50] sm:$0xff] 0.0
          %293 = vst [vmem:[%s269 + $0x58] sm:$0xff] 0.0
          %294 = vst [vmem:[%s269 + $0x60] sm:$0xff] 0.0
          %295 = vst [vmem:[%s269 + $0x68] sm:$0xff] 0.0
          %296 = vst [vmem:[%s269 + $0x70] sm:$0xff] 0.0
          %297 = vst [vmem:[%s269 + $0x78] sm:$0xff] 0.0
          %298 = vst [vmem:[%s269 + $0x80] sm:$0xff] 0.0
          %299 = vst [vmem:[%s269 + $0x88] sm:$0xff] 0.0
        $region40: #{tpu_custom_call.1} parent=27 // pred_fallthru
          _
        %v300 = vld [vmem:[%s244] sm:$0xff]
        %v301 = vld [vmem:[%s244 + $0x8] sm:$0xff]
        %v302 = vld [vmem:[%s244 + $0x10] sm:$0xff]
        %v303 = vld [vmem:[%s244 + $0x18] sm:$0xff]
        %s304 = scalar_lea.vmem %s235, 32 [#allocation2]
        %v305 = vld [vmem:[%s304] sm:$0xff]
        %v306 = vld [vmem:[%s304 + $0x8] sm:$0xff]
        %v307 = vld [vmem:[%s304 + $0x10] sm:$0xff]
        %v308 = vld [vmem:[%s304 + $0x18] sm:$0xff]
        %vm309 = vcmp.eq.s32.totalorder %v300, 1
        %vm310 = vcmp.eq.s32.totalorder %v301, 1
        %vm311 = vcmp.eq.s32.totalorder %v302, 1
        %vm312 = vcmp.eq.s32.totalorder %v303, 1
        %v313 = vsel %vm309, 1, 0
        %v314 = vsel %vm310, 1, 0
        %v315 = vsel %vm311, 1, 0
        %v316 = vsel %vm312, 1, 0
        %v317 = vcvt.s32.f32 %v313
        %v318 = vcvt.s32.f32 %v314
        %v319 = vcvt.s32.f32 %v315
        %v320 = vcvt.s32.f32 %v316
        %v321 = vsub.f32 1.0, %v305
        %v322 = vsub.f32 1.0, %v306
        %v323 = vsub.f32 1.0, %v307
        %v324 = vsub.f32 1.0, %v308
        %v325 = vmax.f32 %v321, 1e-10
        %v326 = vmax.f32 %v322, 1e-10
        %v327 = vmax.f32 %v323, 1e-10
        %v328 = vmax.f32 %v324, 1e-10
        %v329 = vmin.f32 %v325, 1.0
        %v330 = vmin.f32 %v326, 1.0
        %v331 = vmin.f32 %v327, 1.0
        %v332 = vmin.f32 %v328, 1.0
        %v333 = vsel %vm309, %v305, %v329
        %v334 = vsel %vm310, %v306, %v330
        %v335 = vsel %vm311, %v307, %v331
        %v336 = vsel %vm312, %v308, %v332
        %v337 = vlog2.pop %v333
        %v338 = vmul.f32 %v337, 0.6931472
        %v339 = vlog2.pop %v334
        %v340 = vmul.f32 %v339, 0.6931472
        %v341 = vlog2.pop %v335
        %v342 = vmul.f32 %v341, 0.6931472
        %v343 = vlog2.pop %v336
        %v344 = vmul.f32 %v343, 0.6931472
        %v345 = vld [vmem:[%s269] sm:$0xff]
        %v346 = vadd.f32 %v317, %v318
        %v347 = vadd.f32 %v346, %v319
        %v348 = vadd.f32 %v347, %v320
        %v349 = vadd.f32 %v345, %v348
        %350 = vst [vmem:[%s269] sm:$0xff] %v349
        %s351 = scalar_lea.vmem %s269, 8 [#allocation7]
        %v352 = vld [vmem:[%s351] sm:$0xff]
        %v353 = vadd.f32 %v338, %v340
        %v354 = vadd.f32 %v353, %v342
        %v355 = vadd.f32 %v354, %v344
        %v356 = vadd.f32 %v352, %v355
        %357 = vst [vmem:[%s351] sm:$0xff] %v356
        %s358 = scalar_lea.vmem %s269, 16 [#allocation7]
        %v359 = vld [vmem:[%s358] sm:$0xff]
        %v360 = vmul.f32 %v305, %v317
        %v361 = vmul.f32 %v306, %v318
        %v362 = vmul.f32 %v307, %v319
        %v363 = vmul.f32 %v308, %v320
        %v364 = vadd.f32 %v360, %v361
        %v365 = vadd.f32 %v364, %v362
        %v366 = vadd.f32 %v365, %v363
        %v367 = vadd.f32 %v359, %v366
        %368 = vst [vmem:[%s358] sm:$0xff] %v367
        %s369 = scalar_lea.vmem %s269, 24 [#allocation7]
        %v370 = vld [vmem:[%s369] sm:$0xff]
        %v371 = vadd.f32 %v305, %v306
        %v372 = vadd.f32 %v371, %v307
        %v373 = vadd.f32 %v372, %v308
        %v374 = vadd.f32 %v370, %v373
        %375 = vst [vmem:[%s369] sm:$0xff] %v374
        %s376 = scalar_lea.vmem %s269, 32 [#allocation7]
        %v377 = vld [vmem:[%s376] sm:$0xff]
        %v378 = vsub.f32 1.0, %v317
        %v379 = vsub.f32 1.0, %v318
        %v380 = vsub.f32 1.0, %v319
        %v381 = vsub.f32 1.0, %v320
        %v382 = vmul.f32 %v329, %v378
        %v383 = vmul.f32 %v330, %v379
        %v384 = vmul.f32 %v331, %v380
        %v385 = vmul.f32 %v332, %v381
        %v386 = vadd.f32 %v382, %v383
        %v387 = vadd.f32 %v386, %v384
        %v388 = vadd.f32 %v387, %v385
        %v389 = vadd.f32 %v377, %v388
        %390 = vst [vmem:[%s376] sm:$0xff] %v389
        %s391 = scalar_lea.vmem %s269, 40 [#allocation7]
        %v392 = vld [vmem:[%s391] sm:$0xff]
        %v393 = vadd.f32 %v329, %v330
        %v394 = vadd.f32 %v393, %v331
        %v395 = vadd.f32 %v394, %v332
        %v396 = vadd.f32 %v392, %v395
        %397 = vst [vmem:[%s391] sm:$0xff] %v396
        %s398 = scalar_lea.vmem %s235, 64 [#allocation2]
        %v399 = vld [vmem:[%s398] sm:$0xff]
        %v400 = vld [vmem:[%s398 + $0x8] sm:$0xff]
        %v401 = vld [vmem:[%s398 + $0x10] sm:$0xff]
        %v402 = vld [vmem:[%s398 + $0x18] sm:$0xff]
        %vm403 = vcmp.eq.s32.totalorder %v300, 2
        %vm404 = vcmp.eq.s32.totalorder %v301, 2
        %vm405 = vcmp.eq.s32.totalorder %v302, 2
        %vm406 = vcmp.eq.s32.totalorder %v303, 2
        %v407 = vsel %vm403, 1, 0
        %v408 = vsel %vm404, 1, 0
        %v409 = vsel %vm405, 1, 0
        %v410 = vsel %vm406, 1, 0
        %v411 = vcvt.s32.f32 %v407
        %v412 = vcvt.s32.f32 %v408
        %v413 = vcvt.s32.f32 %v409
        %v414 = vcvt.s32.f32 %v410
        %v415 = vsub.f32 1.0, %v399
        %v416 = vsub.f32 1.0, %v400
        %v417 = vsub.f32 1.0, %v401
        %v418 = vsub.f32 1.0, %v402
        %v419 = vmax.f32 %v415, 1e-10
        %v420 = vmax.f32 %v416, 1e-10
        %v421 = vmax.f32 %v417, 1e-10
        %v422 = vmax.f32 %v418, 1e-10
        %v423 = vmin.f32 %v419, 1.0
        %v424 = vmin.f32 %v420, 1.0
        %v425 = vmin.f32 %v421, 1.0
        %v426 = vmin.f32 %v422, 1.0
        %v427 = vsel %vm403, %v399, %v423
        %v428 = vsel %vm404, %v400, %v424
        %v429 = vsel %vm405, %v401, %v425
        %v430 = vsel %vm406, %v402, %v426
        %v431 = vlog2.pop %v427
        %v432 = vmul.f32 %v431, 0.6931472
        %v433 = vlog2.pop %v428
        %v434 = vmul.f32 %v433, 0.6931472
        %v435 = vlog2.pop %v429
        %v436 = vmul.f32 %v435, 0.6931472
        %v437 = vlog2.pop %v430
        %v438 = vmul.f32 %v437, 0.6931472
        %s439 = scalar_lea.vmem %s269, 48 [#allocation7]
        %v440 = vld [vmem:[%s439] sm:$0xff]
        %v441 = vadd.f32 %v411, %v412
        %v442 = vadd.f32 %v441, %v413
        %v443 = vadd.f32 %v442, %v414
        %v444 = vadd.f32 %v440, %v443
        %445 = vst [vmem:[%s439] sm:$0xff] %v444
        %s446 = scalar_lea.vmem %s269, 56 [#allocation7]
        %v447 = vld [vmem:[%s446] sm:$0xff]
        %v448 = vadd.f32 %v432, %v434
        %v449 = vadd.f32 %v448, %v436
        %v450 = vadd.f32 %v449, %v438
        %v451 = vadd.f32 %v447, %v450
        %452 = vst [vmem:[%s446] sm:$0xff] %v451
        %s453 = scalar_lea.vmem %s269, 64 [#allocation7]
        %v454 = vld [vmem:[%s453] sm:$0xff]
        %v455 = vmul.f32 %v399, %v411
        %v456 = vmul.f32 %v400, %v412
        %v457 = vmul.f32 %v401, %v413
        %v458 = vmul.f32 %v402, %v414
        %v459 = vadd.f32 %v455, %v456
        %v460 = vadd.f32 %v459, %v457
        %v461 = vadd.f32 %v460, %v458
        %v462 = vadd.f32 %v454, %v461
        %463 = vst [vmem:[%s453] sm:$0xff] %v462
        %s464 = scalar_lea.vmem %s269, 72 [#allocation7]
        %v465 = vld [vmem:[%s464] sm:$0xff]
        %v466 = vadd.f32 %v399, %v400
        %v467 = vadd.f32 %v466, %v401
        %v468 = vadd.f32 %v467, %v402
        %v469 = vadd.f32 %v465, %v468
        %470 = vst [vmem:[%s464] sm:$0xff] %v469
        %s471 = scalar_lea.vmem %s269, 80 [#allocation7]
        %v472 = vld [vmem:[%s471] sm:$0xff]
        %v473 = vsub.f32 1.0, %v411
        %v474 = vsub.f32 1.0, %v412
        %v475 = vsub.f32 1.0, %v413
        %v476 = vsub.f32 1.0, %v414
        %v477 = vmul.f32 %v423, %v473
        %v478 = vmul.f32 %v424, %v474
        %v479 = vmul.f32 %v425, %v475
        %v480 = vmul.f32 %v426, %v476
        %v481 = vadd.f32 %v477, %v478
        %v482 = vadd.f32 %v481, %v479
        %v483 = vadd.f32 %v482, %v480
        %v484 = vadd.f32 %v472, %v483
        %485 = vst [vmem:[%s471] sm:$0xff] %v484
        %s486 = scalar_lea.vmem %s269, 88 [#allocation7]
        %v487 = vld [vmem:[%s486] sm:$0xff]
        %v488 = vadd.f32 %v423, %v424
        %v489 = vadd.f32 %v488, %v425
        %v490 = vadd.f32 %v489, %v426
        %v491 = vadd.f32 %v487, %v490
        %492 = vst [vmem:[%s486] sm:$0xff] %v491
        %s493 = scalar_lea.vmem %s235, 96 [#allocation2]
        %v494 = vld [vmem:[%s493] sm:$0xff]
        %v495 = vld [vmem:[%s493 + $0x8] sm:$0xff]
        %v496 = vld [vmem:[%s493 + $0x10] sm:$0xff]
        %v497 = vld [vmem:[%s493 + $0x18] sm:$0xff]
        %vm498 = vcmp.eq.s32.totalorder %v300, 3
        %vm499 = vcmp.eq.s32.totalorder %v301, 3
        %vm500 = vcmp.eq.s32.totalorder %v302, 3
        %vm501 = vcmp.eq.s32.totalorder %v303, 3
        %v502 = vsel %vm498, 1, 0
        %v503 = vsel %vm499, 1, 0
        %v504 = vsel %vm500, 1, 0
        %v505 = vsel %vm501, 1, 0
        %v506 = vcvt.s32.f32 %v502
        %v507 = vcvt.s32.f32 %v503
        %v508 = vcvt.s32.f32 %v504
        %v509 = vcvt.s32.f32 %v505
        %v510 = vsub.f32 1.0, %v494
        %v511 = vsub.f32 1.0, %v495
        %v512 = vsub.f32 1.0, %v496
        %v513 = vsub.f32 1.0, %v497
        %v514 = vmax.f32 %v510, 1e-10
        %v515 = vmax.f32 %v511, 1e-10
        %v516 = vmax.f32 %v512, 1e-10
        %v517 = vmax.f32 %v513, 1e-10
        %v518 = vmin.f32 %v514, 1.0
        %v519 = vmin.f32 %v515, 1.0
        %v520 = vmin.f32 %v516, 1.0
        %v521 = vmin.f32 %v517, 1.0
        %v522 = vsel %vm498, %v494, %v518
        %v523 = vsel %vm499, %v495, %v519
        %v524 = vsel %vm500, %v496, %v520
        %v525 = vsel %vm501, %v497, %v521
        %v526 = vlog2.pop %v522
        %v527 = vmul.f32 %v526, 0.6931472
        %v528 = vlog2.pop %v523
        %v529 = vmul.f32 %v528, 0.6931472
        %v530 = vlog2.pop %v524
        %v531 = vmul.f32 %v530, 0.6931472
        %v532 = vlog2.pop %v525
        %v533 = vmul.f32 %v532, 0.6931472
        %s534 = scalar_lea.vmem %s269, 96 [#allocation7]
        %v535 = vld [vmem:[%s534] sm:$0xff]
        %v536 = vadd.f32 %v506, %v507
        %v537 = vadd.f32 %v536, %v508
        %v538 = vadd.f32 %v537, %v509
        %v539 = vadd.f32 %v535, %v538
        %540 = vst [vmem:[%s534] sm:$0xff] %v539
        %s541 = scalar_lea.vmem %s269, 104 [#allocation7]
        %v542 = vld [vmem:[%s541] sm:$0xff]
        %v543 = vadd.f32 %v527, %v529
        %v544 = vadd.f32 %v543, %v531
        %v545 = vadd.f32 %v544, %v533
        %v546 = vadd.f32 %v542, %v545
        %547 = vst [vmem:[%s541] sm:$0xff] %v546
        %s548 = scalar_lea.vmem %s269, 112 [#allocation7]
        %v549 = vld [vmem:[%s548] sm:$0xff]
        %v550 = vmul.f32 %v494, %v506
        %v551 = vmul.f32 %v495, %v507
        %v552 = vmul.f32 %v496, %v508
        %v553 = vmul.f32 %v497, %v509
        %v554 = vadd.f32 %v550, %v551
        %v555 = vadd.f32 %v554, %v552
        %v556 = vadd.f32 %v555, %v553
        %v557 = vadd.f32 %v549, %v556
        %558 = vst [vmem:[%s548] sm:$0xff] %v557
        %s559 = scalar_lea.vmem %s269, 120 [#allocation7]
        %v560 = vld [vmem:[%s559] sm:$0xff]
        %v561 = vadd.f32 %v494, %v495
        %v562 = vadd.f32 %v561, %v496
        %v563 = vadd.f32 %v562, %v497
        %v564 = vadd.f32 %v560, %v563
        %565 = vst [vmem:[%s559] sm:$0xff] %v564
        %s566 = scalar_lea.vmem %s269, 128 [#allocation7]
        %v567 = vld [vmem:[%s566] sm:$0xff]
        %v568 = vsub.f32 1.0, %v506
        %v569 = vsub.f32 1.0, %v507
        %v570 = vsub.f32 1.0, %v508
        %v571 = vsub.f32 1.0, %v509
        %v572 = vmul.f32 %v518, %v568
        %v573 = vmul.f32 %v519, %v569
        %v574 = vmul.f32 %v520, %v570
        %v575 = vmul.f32 %v521, %v571
        %v576 = vadd.f32 %v572, %v573
        %v577 = vadd.f32 %v576, %v574
        %v578 = vadd.f32 %v577, %v575
        %v579 = vadd.f32 %v567, %v578
        %580 = vst [vmem:[%s566] sm:$0xff] %v579
        %s581 = scalar_lea.vmem %s269, 136 [#allocation7]
        %v582 = vld [vmem:[%s581] sm:$0xff]
        %v583 = vadd.f32 %v518, %v519
        %v584 = vadd.f32 %v583, %v520
        %v585 = vadd.f32 %v584, %v521
        %v586 = vadd.f32 %v582, %v585
        %587 = vst [vmem:[%s581] sm:$0xff] %v586
        %s588 = sand.u32 %s117, 1
        %s589 = scalar_lea.sflag [#allocation4], %s588
        %s590 = sand.u32 %s117, 1
        %s591 = smul.addr %s590, 144
        %s592 = scalar_lea.vmem [#allocation7], %s591
        // Predicated region
        $region41: #{tpu_custom_call.1} parent=27 // pred_check
          %p593 = pneg %p127
        $region42: #{tpu_custom_call.1} parent=27 // pred_check_branch
          %595 = sbr.rel (%p593) target = $region44
        $region43: #{tpu_custom_call.1} parent=27 // pred_region
          %s596 = smul.u32 %s27, 2
          %s597 = sadd.s32 %s596, %s28
          %s599 = ssub.s32 2304, 2304
          %600 = vsyncadd %s589, %s599
          %s601 = smul.addr %s597, 18
          %s602 = smul.addr %s601, 128
          %s603 = scalar_lea.hbm %s2, %s602
          %s604 = sshll.u32 %s592, 4
          %s605 = int_to_ptr.vmem [resolvable:$true] %s604
          %610 = dma.vmem_to_hbm [thread:$0]  %s605, 2304, %s603, %s589, 128, 128, 8
        $region44: #{tpu_custom_call.1} parent=27 // pred_fallthru
          _
      $region28: #{tpu_custom_call.1} parent=5 // pred_fallthru
        _
      %p611 = scmp.le.s32.totalorder 2, %s17
      // Predicated region
      $region45: #{tpu_custom_call.1} parent=5 // pred_check
        %p612 = pneg %p611
      $region46: #{tpu_custom_call.1} parent=5 // pred_check_branch
        %614 = sbr.rel (%p612) target = $region48
      $region47: #{tpu_custom_call.1} parent=5 // pred_region
        %s615 = ssub.s32 %s17, 2
        // Predicated region
        $region49: #{tpu_custom_call.1} parent=47 // pred_check
          %p616 = pneg %p133
        $region50: #{tpu_custom_call.1} parent=47 // pred_check_branch
          %618 = sbr.rel (%p616) target = $region52
        $region51: #{tpu_custom_call.1} parent=47 // pred_region
          %s619 = sand.u32 %s118, 1
          %s620 = scalar_lea.sflag [#allocation4], %s619
          %s621 = sand.u32 %s118, 1
          %s622 = smul.addr %s621, 144
          %s623 = scalar_lea.vmem [#allocation7], %s622
          %624 = dma.done %s620, 2304
        $region52: #{tpu_custom_call.1} parent=47 // pred_fallthru
          _
      $region48: #{tpu_custom_call.1} parent=5 // pred_fallthru
        _
    $region6: #{tpu_custom_call.1} parent=1 // loop_footer
      %s21 = sadd.s32 1, %s17
    $region7: #{tpu_custom_call.1} parent=1 // loop_footer_branch
      %16 = sbr.rel target = $region3
    $region8: #{tpu_custom_call.1} parent=1 // loop_exit
      _
    %625 = vsyncpa [#allocation3], 1
    %s626 = scalar_lea.sflag [#allocation3], 1
    %627 = vsyncpa %s626, 1
    %628 = vsyncpa [#allocation6], 1
    %s629 = scalar_lea.sflag [#allocation6], 1
    %630 = vsyncpa %s629, 1
    %631 = vsyncpa [#allocation4], 1
    %s632 = scalar_lea.sflag [#allocation4], 1
    %633 = vsyncpa %s632, 1

</llo_original>
